<compile_context>
chip_gen: v7x
topology: tpu7x:2x2x1
jax: 0.10.0
libtpu: 0.0.40
codegen_flags: <defaults>
</compile_context>

<pallas_src>
import math
import functools

import jax
import jax.numpy as jnp
from jax.experimental import pallas as pl
from jax.experimental.pallas import tpu as pltpu


LANE = 128                     # TPU vreg lane width
_MAX_ROWS_PER_BLOCK = 2048     # 2048 rows * 128 lanes * 4 B = 1 MiB per array block


# ---------------------------------------------------------------------------
# Buffer construction (deterministic, mirrors nn.Module.__init__)
# ---------------------------------------------------------------------------
def make_positional_encoding(d_model: int, max_len: int = 50) -> jnp.ndarray:
    assert d_model % 2 == 0, "d_model must be even (same constraint as the PyTorch module)"
    position = jnp.arange(0, max_len, dtype=jnp.float32)[:, None]            # (max_len, 1)
    div_term = jnp.exp(
        jnp.arange(0, d_model, 2, dtype=jnp.float32) * -(math.log(10000.0) / d_model)
    )                                                                          # (d_model//2,)
    angles = position * div_term                                               # (max_len, d_model//2)
    pe = jnp.zeros((max_len, d_model), dtype=jnp.float32)
    pe = pe.at[:, 0::2].set(jnp.sin(angles))
    pe = pe.at[:, 1::2].set(jnp.cos(angles))
    return pe                                                                  # (max_len, d_model)


# ---------------------------------------------------------------------------
# Kernels (operate on lane-dense (BB, TR, 128) blocks)
# ---------------------------------------------------------------------------
def _pe_add_kernel(x_ref, pe_ref, o_ref):
    # x_ref: (BB, TR, 128), pe_ref: (TR, 128) -> broadcasted VPU add, full-lane store.
    o_ref[...] = (x_ref[...] + pe_ref[...]).astype(o_ref.dtype)


def _pe_add_dropout_kernel(x_ref, pe_ref, bits_ref, o_ref, *, threshold: int, scale: float):
    # Inverted dropout: keep iff raw uint32 bits >= threshold (P(keep) = 1 - p).
    y = x_ref[...] + pe_ref[...]
    keep = bits_ref[...] >= jnp.uint32(threshold)
    o_ref[...] = jnp.where(keep, y * jnp.float32(scale), jnp.float32(0.0)).astype(o_ref.dtype)


# ---------------------------------------------------------------------------
# Tiling choice
# ---------------------------------------------------------------------------
def _choose_tiles(B: int, rows: int):
    if rows <= _MAX_ROWS_PER_BLOCK:
        tr = rows  # full row extent per block (satisfies the (8,128) rule: equals full dim)
        bb = max(1, min(B, _MAX_ROWS_PER_BLOCK // max(1, rows)))
        while B % bb:          # keep the batch grid non-ragged
            bb -= 1
    else:
        tr = _MAX_ROWS_PER_BLOCK   # multiple of 8
        bb = 1
    return bb, tr


# ---------------------------------------------------------------------------
# Wrapper
# ---------------------------------------------------------------------------
def positional_encoding_forward(x, pe, *, p: float = 0.1, training: bool = False, key=None):
    """x: (B, S, D) float32; pe: (max_len, D) float32. Returns (B, S, D)."""
    B, S, D = x.shape
    assert S <= pe.shape[0], "sequence length exceeds max_len of the PE buffer"
    pe_s = pe[:S, :].astype(x.dtype)                     # glue: pe[:, :x.size(1)]

    # ---- lane-dense repack: flatten (S, D) and pad to a multiple of 128 lanes ----
    flat = S * D
    pad = (-flat) % LANE
    rows = (flat + pad) // LANE

    x2 = x.reshape(B, flat)
    pe2 = pe_s.reshape(flat)
    if pad:
        x2 = jnp.pad(x2, ((0, 0), (0, pad)))
        pe2 = jnp.pad(pe2, ((0, pad),))
    x3 = x2.reshape(B, rows, LANE)
    pe3 = pe2.reshape(rows, LANE)

    bb, tr = _choose_tiles(B, rows)
    grid = (pl.cdiv(B, bb), pl.cdiv(rows, tr))

    x_spec = pl.BlockSpec((bb, tr, LANE), lambda b, r: (b, r, 0))
    pe_spec = pl.BlockSpec((tr, LANE), lambda b, r: (r, 0))
    out_spec = pl.BlockSpec((bb, tr, LANE), lambda b, r: (b, r, 0))
    cparams = pltpu.CompilerParams(dimension_semantics=("parallel", "parallel"))
    out_shape = jax.ShapeDtypeStruct((B, rows, LANE), x.dtype)

    if (not training) or p == 0.0:
        out3 = pl.pallas_call(
            _pe_add_kernel,
            out_shape=out_shape,
            grid_spec=pltpu.PrefetchScalarGridSpec(
                num_scalar_prefetch=0,
                grid=grid,
                in_specs=[x_spec, pe_spec],
                out_specs=out_spec,
            ),
            compiler_params=cparams,
        )(x3, pe3)
    else:
        if key is None:
            key = jax.random.PRNGKey(0)
        # TODO(synk): switch to the in-kernel hardware PRNG (pltpu.prng_random_bits)
        # when targeting real TPUs only; it would save the extra uint32 HBM read.
        bits = jax.random.bits(key, (B, rows, LANE), dtype=jnp.uint32)
        threshold = min(int(round(p * float(2 ** 32))), 2 ** 32 - 1)
        scale = 1.0 / (1.0 - p)
        out3 = pl.pallas_call(
            functools.partial(_pe_add_dropout_kernel, threshold=threshold, scale=scale),
            out_shape=out_shape,
            grid_spec=pltpu.PrefetchScalarGridSpec(
                num_scalar_prefetch=0,
                grid=grid,
                in_specs=[x_spec, pe_spec, x_spec],   # bits share x's tiling
                out_specs=out_spec,
            ),
            compiler_params=cparams,
        )(x3, pe3, bits)

    # ---- unpack back to (B, S, D) (drops the lane padding, if any) ----
    return out3.reshape(B, rows * LANE)[:, :flat].reshape(B, S, D)


# ---------------------------------------------------------------------------
# Main
# ---------------------------------------------------------------------------
if __name__ == "__main__":
    B, S, D = 2, 8, 32        # batch=2, seq=8, d_model=32
    MAX_LEN = 50
    P_DROP = 0.1

    key = jax.random.PRNGKey(0)
    x = jax.random.normal(key, (B, S, D), dtype=jnp.float32)
    pe = make_positional_encoding(D, MAX_LEN)
    ref = x + pe[None, :S, :]

    # Eval-mode forward (dropout is identity): exact, deterministic semantics.
    out = positional_encoding_forward(x, pe, p=P_DROP, training=False)
    out = jax.block_until_ready(out)
    assert out.shape == (B, S, D)
    assert jnp.allclose(out, ref, atol=1e-6, rtol=1e-6), "mismatch vs reference"

    # Training-mode forward (inverted dropout, p=0.1).
    out_train = positional_encoding_forward(
        x, pe, p=P_DROP, training=True, key=jax.random.PRNGKey(42)
    )
    out_train = jax.block_until_ready(out_train)
    assert out_train.shape == (B, S, D)
    # Surviving elements equal ref / (1-p); dropped ones are 0.
    kept = out_train != 0.0
    assert jnp.allclose(jnp.where(kept, out_train * (1.0 - P_DROP), ref), ref, atol=1e-5)

    print("KERNEL_OK")
</pallas_src>

<mosaic_0001>
module attributes {stable_mosaic.version = 11 : i64} {
  func.func @_pe_add_kernel(%arg0: i32, %arg1: i32, %arg2: memref<2x2x128xf32, #tpu.memory_space<vmem>>, %arg3: memref<2x128xf32, #tpu.memory_space<vmem>>, %arg4: memref<2x2x128xf32, #tpu.memory_space<vmem>>) attributes {dimension_semantics = [#tpu.dimension_semantics<parallel>, #tpu.dimension_semantics<parallel>], iteration_bounds = array<i64: 1, 1>, scalar_prefetch = 0 : i64, scratch_operands = 0 : i64, tpu.core_type = #tpu.core_type<tc>, window_params = [{transform_indices = @transform_0, window_bounds = array<i64: 2, 2, 128>}, {transform_indices = @transform_1, window_bounds = array<i64: 2, 128>}, {transform_indices = @transform_2, window_bounds = array<i64: 2, 2, 128>}]} {
    %c0 = arith.constant 0 : index
    %c0_0 = arith.constant 0 : index
    %c0_1 = arith.constant 0 : index
    %0 = vector.load %arg2[%c0, %c0_0, %c0_1] : memref<2x2x128xf32, #tpu.memory_space<vmem>>, vector<2x2x128xf32>
    %c0_2 = arith.constant 0 : index
    %c0_3 = arith.constant 0 : index
    %1 = vector.load %arg3[%c0_2, %c0_3] : memref<2x128xf32, #tpu.memory_space<vmem>>, vector<2x128xf32>
    %2 = vector.shape_cast %1 : vector<2x128xf32> to vector<1x2x128xf32>
    %3 = vector.broadcast %2 : vector<1x2x128xf32> to vector<2x2x128xf32>
    %4 = arith.addf %0, %3 : vector<2x2x128xf32>
    %c0_4 = arith.constant 0 : index
    %c0_5 = arith.constant 0 : index
    %c0_6 = arith.constant 0 : index
    %5 = vector.load %arg4[%c0_4, %c0_5, %c0_6] : memref<2x2x128xf32, #tpu.memory_space<vmem>>, vector<2x2x128xf32>
    tpu.vector_store %arg4[%c0_4, %c0_5, %c0_6], %4 {strides = array<i32>} : memref<2x2x128xf32, #tpu.memory_space<vmem>>, vector<2x2x128xf32>,
    return
  }
  func.func @transform_0(%arg0: i32, %arg1: i32) -> (i32, i32, i32) {
    %c0_i32 = arith.constant 0 : i32
    %c0_i32_0 = arith.constant 0 : i32
    return %arg0, %arg1, %c0_i32 : i32, i32, i32
  }
  func.func @transform_1(%arg0: i32, %arg1: i32) -> (i32, i32) {
    %c0_i32 = arith.constant 0 : i32
    %c0_i32_0 = arith.constant 0 : i32
    return %arg1, %c0_i32 : i32, i32
  }
  func.func @transform_2(%arg0: i32, %arg1: i32) -> (i32, i32, i32) {
    %c0_i32 = arith.constant 0 : i32
    %c0_i32_0 = arith.constant 0 : i32
    return %arg0, %arg1, %c0_i32 : i32, i32, i32
  }
}

</mosaic_0001>

<llo_original>
// kernel: tpu_custom_call.1
$region0: #{tpu_custom_call.1}
  #allocation0 [shape = 'u32[]', space=smem, size = 0x4, offset = 0x4, fixed_abs, tag = 'smem constant byte address 0x4 - core index']
  #allocation1 [shape = 'u32[144,128]{1,0:T(1,128)}', space=vmem, size = 0x12000, scoped, tag = 'internal scratch']
  %s0 = inlined_call_operand.hbm [shape: f32[2,2,128], index: 0, kind: input, shape index: {}]
  %s1 = inlined_call_operand.vmem [shape: f32[2,128], index: 1, kind: input, shape index: {}]
  %s2 = inlined_call_operand.hbm [shape: f32[2,2,128], index: 2, kind: output, shape index: {}]
  %s3 = sld [smem:[#allocation0]]
  $region22: #{tpu_custom_call.1} parent=0
    _
  %s5 = ssub.s32 1, %s3
  %s6 = scalar_select 0, %s5, %s3
  $region1: #{tpu_custom_call.1} parent=0
    #allocation2 [shape = 'u8[2048]{0}', space=vmem, size = 0x800, scoped, tag = 'input window, operand 0, single buffered']
    #allocation3 [shape = 's32[1]{0}', space=sflag, size = 0x4, scoped, tag = 'scoped memory for tpu_custom_call.1']
    #allocation4 [shape = 's32[1]{0}', space=sflag, size = 0x4, scoped, tag = 'scoped memory for tpu_custom_call.1']
    #allocation5 [shape = 'u8[2048]{0}', space=vmem, size = 0x800, scoped, tag = 'output window, operand 0, single buffered']
    %7 = vsyncpa [#allocation3], 0
    %8 = vsyncpa [#allocation4], 0
    // Predicated region
    $region2: #{tpu_custom_call.1} parent=1 // pred_check
      _
    $region3: #{tpu_custom_call.1} parent=1 // pred_check_branch
      %10 = sbr.rel (0) target = $region5
    $region4: #{tpu_custom_call.1} parent=1 // pred_region
      %s12 = ssub.s32 64, 64
      %13 = vsyncadd [#allocation3], %s12
      %s14 = sshll.u32 [#allocation2], 4
      %s15 = int_to_ptr.vmem [resolvable:$true] %s14
      %20 = dma.hbm_to_vmem [thread:$0]  %s0, 64, %s15, [#allocation3], 32, 32, 2
    $region5: #{tpu_custom_call.1} parent=1 // pred_fallthru
      _
    // Predicated region
    $region6: #{tpu_custom_call.1} parent=1 // pred_check
      _
    $region7: #{tpu_custom_call.1} parent=1 // pred_check_branch
      %22 = sbr.rel (0) target = $region9
    $region8: #{tpu_custom_call.1} parent=1 // pred_region
      _
    $region9: #{tpu_custom_call.1} parent=1 // pred_fallthru
      _
    // Predicated region
    $region10: #{tpu_custom_call.1} parent=1 // pred_check
      _
    $region11: #{tpu_custom_call.1} parent=1 // pred_check_branch
      %24 = sbr.rel (0) target = $region13
    $region12: #{tpu_custom_call.1} parent=1 // pred_region
      %25 = dma.done [#allocation3], 64
    $region13: #{tpu_custom_call.1} parent=1 // pred_fallthru
      _
    %v26 = vld [vmem:[#allocation2] sm:$0x3]
    %v27 = vld [vmem:[#allocation2 + $0x2] sm:$0x3]
    %v28 = vld [vmem:[%s1] sm:$0x3]
    %v29 = vadd.f32 %v26, %v28
    %v30 = vadd.f32 %v27, %v28
    %31 = vst [vmem:[#allocation5] sm:$0x3] %v29
    %32 = vst [vmem:[#allocation5 + $0x2] sm:$0x3] %v30
    // Predicated region
    $region14: #{tpu_custom_call.1} parent=1 // pred_check
      _
    $region15: #{tpu_custom_call.1} parent=1 // pred_check_branch
      %34 = sbr.rel (0) target = $region17
    $region16: #{tpu_custom_call.1} parent=1 // pred_region
      %s36 = ssub.s32 64, 64
      %37 = vsyncadd [#allocation4], %s36
      %s38 = sshll.u32 [#allocation5], 4
      %s39 = int_to_ptr.vmem [resolvable:$true] %s38
      %44 = dma.vmem_to_hbm [thread:$0]  %s39, 64, %s2, [#allocation4], 32, 32, 2
    $region17: #{tpu_custom_call.1} parent=1 // pred_fallthru
      _
    // Predicated region
    $region18: #{tpu_custom_call.1} parent=1 // pred_check
      _
    $region19: #{tpu_custom_call.1} parent=1 // pred_check_branch
      %46 = sbr.rel (0) target = $region21
    $region20: #{tpu_custom_call.1} parent=1 // pred_region
      %47 = dma.done [#allocation4], 64
    $region21: #{tpu_custom_call.1} parent=1 // pred_fallthru
      _
    %48 = vsyncpa [#allocation3], 1
    %49 = vsyncpa [#allocation4], 1

</llo_original>
